<compile_context>
chip_gen: v7x
topology: tpu7x:2x2x1
jax: 0.10.0
libtpu: 0.0.40
codegen_flags: <defaults>
</compile_context>

<pallas_src>
import functools
import math

import jax
import jax.numpy as jnp
from jax.experimental import pallas as pl
from jax.experimental.pallas import tpu as pltpu


def _arc_margin_kernel(x_ref, wpt_ref, bp_ref, wt_ref, lab_ref, o_ref, *,
                       s, cos_m, sin_m, th, mm, easy_margin, training):
    # ---- projection: y = x @ Wp^T + bp  (Wp is pre-transposed: (in_f, mid_f))
    x = x_ref[...].astype(jnp.float32)                     # (TB, in_f)
    wpt = wpt_ref[...].astype(jnp.float32)                 # (in_f, mid_f)
    bp = bp_ref[...].astype(jnp.float32)                   # (1, mid_f)
    y = jnp.dot(x, wpt, preferred_element_type=jnp.float32) + bp   # (TB, mid_f)

    # ---- F.normalize(y, dim=-1), eps = 1e-12
    y_nrm = jnp.sqrt(jnp.sum(y * y, axis=-1, keepdims=True))
    y_n = y / jnp.maximum(y_nrm, 1e-12)

    # ---- F.normalize(weight, dim=-1): weight passed transposed (mid_f, out_f),
    #      so per-class norms are column norms.
    wt = wt_ref[...].astype(jnp.float32)                   # (mid_f, out_f)
    w_nrm = jnp.sqrt(jnp.sum(wt * wt, axis=0, keepdims=True))  # (1, out_f)
    w_n = wt / jnp.maximum(w_nrm, 1e-12)

    # ---- cosine logits
    cosine = jnp.dot(y_n, w_n, preferred_element_type=jnp.float32)  # (TB, out_f)
    cosine = jnp.clip(cosine, -1.0, 1.0)

    if training:
        # ---- ArcFace margin
        sine = jnp.sqrt(jnp.maximum(1.0 - cosine * cosine, 0.0))
        phi = cosine * cos_m - sine * sin_m
        if easy_margin:
            phi = jnp.where(cosine > 0.0, phi, cosine)
        else:
            phi = jnp.where(cosine > th, phi, cosine - mm)

        lab = lab_ref[...]                                   # (TB, 1) int32
        col = jax.lax.broadcasted_iota(jnp.int32, cosine.shape, 1)
        one_hot = col == lab                                 # (TB, out_f) bool
        out = jnp.where(one_hot, phi, cosine) * s
    else:
        out = cosine * s

    o_ref[...] = out.astype(o_ref.dtype)


def arc_margin_product(x, label, proj_w, proj_b, weight, *,
                       scale_size=64.0, m=0.5, easy_margin=False,
                       training=True, block_rows=8):
    """ArcMarginProduct.forward.

    x:      (B, in_feature)
    label:  (B,) int
    proj_w: (middle_feature, in_feature)   -- nn.Linear weight
    proj_b: (middle_feature,)              -- nn.Linear bias
    weight: (out_feature, middle_feature)  -- ArcFace class weights
    returns (B, out_feature)
    """
    B, in_f = x.shape
    mid_f = proj_w.shape[0]
    out_f = weight.shape[0]
    assert proj_w.shape == (mid_f, in_f)
    assert proj_b.shape == (mid_f,)
    assert weight.shape == (out_f, mid_f)

    # Batch tile: multiple of 8 (sublane-dense) when possible.
    if B % block_rows != 0 or block_rows % 8 != 0:
        block_rows = B  # single full-batch block (always legal: equals full dim)
    grid = (B // block_rows,)

    kernel = functools.partial(
        _arc_margin_kernel,
        s=float(scale_size),
        cos_m=math.cos(m), sin_m=math.sin(m),
        th=math.cos(math.pi - m), mm=math.sin(math.pi - m) * m,
        easy_margin=easy_margin, training=training)

    # Pre-transpose the (tiny) weights once in the wrapper so both in-kernel
    # matmuls are plain row-major MXU dots (no in-kernel XLU transpose).
    wpt = proj_w.T                                # (in_f, mid_f)
    bp2d = proj_b.reshape(1, mid_f)               # (1, mid_f)
    wt = weight.T                                 # (mid_f, out_f)
    lab2d = label.astype(jnp.int32).reshape(B, 1)

    return pl.pallas_call(
        kernel,
        out_shape=jax.ShapeDtypeStruct((B, out_f), x.dtype),
        grid_spec=pltpu.PrefetchScalarGridSpec(
            num_scalar_prefetch=0,
            grid=grid,
            in_specs=[
                pl.BlockSpec((block_rows, in_f), lambda i: (i, 0)),  # x rows
                pl.BlockSpec((in_f, mid_f), lambda i: (0, 0)),       # Wp^T
                pl.BlockSpec((1, mid_f), lambda i: (0, 0)),          # bias
                pl.BlockSpec((mid_f, out_f), lambda i: (0, 0)),      # W^T
                pl.BlockSpec((block_rows, 1), lambda i: (i, 0)),     # labels
            ],
            out_specs=pl.BlockSpec((block_rows, out_f), lambda i: (i, 0)),
        ),
        compiler_params=pltpu.CompilerParams(
            dimension_semantics=("parallel",)),
    )(x, wpt, bp2d, wt, lab2d)


if __name__ == "__main__":
    key = jax.random.PRNGKey(0)
    B, in_f, mid_f, out_f = 16, 32, 32, 64
    k1, k2, k3, k4, k5 = jax.random.split(key, 5)

    x = jax.random.normal(k1, (B, in_f), dtype=jnp.float32)
    proj_w = jax.random.normal(k2, (mid_f, in_f), dtype=jnp.float32) / math.sqrt(in_f)
    proj_b = 0.1 * jax.random.normal(k3, (mid_f,), dtype=jnp.float32)
    weight = jax.random.normal(k4, (out_f, mid_f), dtype=jnp.float32) / math.sqrt(mid_f)
    label = jax.random.randint(k5, (B,), 0, out_f, dtype=jnp.int32)

    out = arc_margin_product(x, label, proj_w, proj_b, weight,
                             scale_size=64.0, m=0.5, easy_margin=False)
    jax.block_until_ready(out)

    # ---- pure-JAX reference (training-mode forward, easy_margin=False) ----
    s, m = 64.0, 0.5
    cos_m, sin_m = math.cos(m), math.sin(m)
    th, mm = math.cos(math.pi - m), math.sin(math.pi - m) * m
    hp = jax.lax.Precision.HIGHEST

    y = jnp.dot(x, proj_w.T, precision=hp) + proj_b
    y_n = y / jnp.maximum(jnp.linalg.norm(y, axis=-1, keepdims=True), 1e-12)
    w_n = weight / jnp.maximum(jnp.linalg.norm(weight, axis=-1, keepdims=True), 1e-12)
    cosine = jnp.clip(jnp.dot(y_n, w_n.T, precision=hp), -1.0, 1.0)
    sine = jnp.sqrt(jnp.maximum(1.0 - cosine ** 2, 0.0))
    phi = cosine * cos_m - sine * sin_m
    phi = jnp.where(cosine > th, phi, cosine - mm)
    one_hot = jax.nn.one_hot(label, out_f, dtype=cosine.dtype)
    ref = (one_hot * phi + (1.0 - one_hot) * cosine) * s

    assert out.shape == (B, out_f), out.shape
    max_err = float(jnp.max(jnp.abs(out - ref)))
    assert jnp.allclose(out, ref, atol=1e-1, rtol=1e-2), f"max_err={max_err}"

    print("KERNEL_OK")
</pallas_src>

<mosaic_0001>
module attributes {stable_mosaic.version = 11 : i64} {
  func.func @_arc_margin_kernel(%arg0: i32, %arg1: memref<8x32xf32, #tpu.memory_space<vmem>>, %arg2: memref<32x32xf32, #tpu.memory_space<vmem>>, %arg3: memref<1x32xf32, #tpu.memory_space<vmem>>, %arg4: memref<32x64xf32, #tpu.memory_space<vmem>>, %arg5: memref<8x1xi32, #tpu.memory_space<vmem>>, %arg6: memref<8x64xf32, #tpu.memory_space<vmem>>) attributes {dimension_semantics = [#tpu.dimension_semantics<parallel>], iteration_bounds = array<i64: 2>, scalar_prefetch = 0 : i64, scratch_operands = 0 : i64, tpu.core_type = #tpu.core_type<tc>, window_params = [{transform_indices = @transform_0, window_bounds = array<i64: 8, 32>}, {pipeline_mode = #tpu.pipeline_mode<synchronous>, transform_indices = @transform_1, window_bounds = array<i64: 32, 32>}, {pipeline_mode = #tpu.pipeline_mode<synchronous>, transform_indices = @transform_2, window_bounds = array<i64: 1, 32>}, {pipeline_mode = #tpu.pipeline_mode<synchronous>, transform_indices = @transform_3, window_bounds = array<i64: 32, 64>}, {transform_indices = @transform_4, window_bounds = array<i64: 8, 1>}, {transform_indices = @transform_5, window_bounds = array<i64: 8, 64>}]} {
    %c0 = arith.constant 0 : index
    %c0_0 = arith.constant 0 : index
    %0 = vector.load %arg1[%c0, %c0_0] : memref<8x32xf32, #tpu.memory_space<vmem>>, vector<8x32xf32>
    %c0_1 = arith.constant 0 : index
    %c0_2 = arith.constant 0 : index
    %1 = vector.load %arg2[%c0_1, %c0_2] : memref<32x32xf32, #tpu.memory_space<vmem>>, vector<32x32xf32>
    %c0_3 = arith.constant 0 : index
    %c0_4 = arith.constant 0 : index
    %2 = vector.load %arg3[%c0_3, %c0_4] : memref<1x32xf32, #tpu.memory_space<vmem>>, vector<1x32xf32>
    %cst = arith.constant dense<0.000000e+00> : vector<8x32xf32>
    %3 = tpu.matmul %0, %1, %cst {dimension_numbers = #tpu.dot_dimension_numbers<[1], [0], [0], [1], [0, 0, 1, 1], [], []>} : vector<8x32xf32>, vector<32x32xf32>, vector<8x32xf32> -> vector<8x32xf32>
    %4 = vector.broadcast %2 : vector<1x32xf32> to vector<8x32xf32>
    %5 = arith.addf %3, %4 : vector<8x32xf32>
    %6 = arith.mulf %5, %5 : vector<8x32xf32>
    %cst_5 = arith.constant dense<0.000000e+00> : vector<8xf32>
    %7 = vector.multi_reduction <add>, %6, %cst_5 [1] : vector<8x32xf32> to vector<8xf32>
    %8 = vector.shape_cast %7 : vector<8xf32> to vector<8x1xf32>
    %9 = math.sqrt %8 : vector<8x1xf32>
    %cst_6 = arith.constant 9.99999996E-13 : f32
    %10 = vector.broadcast %cst_6 : f32 to vector<8x1xf32>
    %11 = arith.maximumf %9, %10 : vector<8x1xf32>
    %12 = vector.broadcast %11 : vector<8x1xf32> to vector<8x32xf32>
    %13 = arith.divf %5, %12 : vector<8x32xf32>
    %c0_7 = arith.constant 0 : index
    %c0_8 = arith.constant 0 : index
    %14 = vector.load %arg4[%c0_7, %c0_8] : memref<32x64xf32, #tpu.memory_space<vmem>>, vector<32x64xf32>
    %15 = arith.mulf %14, %14 : vector<32x64xf32>
    %cst_9 = arith.constant dense<0.000000e+00> : vector<64xf32>
    %16 = vector.multi_reduction <add>, %15, %cst_9 [0] : vector<32x64xf32> to vector<64xf32>
    %17 = vector.shape_cast %16 : vector<64xf32> to vector<1x64xf32>
    %18 = math.sqrt %17 : vector<1x64xf32>
    %cst_10 = arith.constant 9.99999996E-13 : f32
    %19 = vector.broadcast %cst_10 : f32 to vector<1x64xf32>
    %20 = arith.maximumf %18, %19 : vector<1x64xf32>
    %21 = vector.broadcast %20 : vector<1x64xf32> to vector<32x64xf32>
    %22 = arith.divf %14, %21 : vector<32x64xf32>
    %cst_11 = arith.constant dense<0.000000e+00> : vector<8x64xf32>
    %23 = tpu.matmul %13, %22, %cst_11 {dimension_numbers = #tpu.dot_dimension_numbers<[1], [0], [0], [1], [0, 0, 1, 1], [], []>} : vector<8x32xf32>, vector<32x64xf32>, vector<8x64xf32> -> vector<8x64xf32>
    %cst_12 = arith.constant -1.000000e+00 : f32
    %cst_13 = arith.constant 1.000000e+00 : f32
    %24 = vector.broadcast %cst_12 : f32 to vector<8x64xf32>
    %25 = arith.maximumf %24, %23 : vector<8x64xf32>
    %26 = vector.broadcast %cst_13 : f32 to vector<8x64xf32>
    %27 = arith.minimumf %26, %25 : vector<8x64xf32>
    %28 = arith.mulf %27, %27 : vector<8x64xf32>
    %cst_14 = arith.constant 1.000000e+00 : f32
    %29 = vector.broadcast %cst_14 : f32 to vector<8x64xf32>
    %30 = arith.subf %29, %28 : vector<8x64xf32>
    %cst_15 = arith.constant 0.000000e+00 : f32
    %31 = vector.broadcast %cst_15 : f32 to vector<8x64xf32>
    %32 = arith.maximumf %30, %31 : vector<8x64xf32>
    %33 = math.sqrt %32 : vector<8x64xf32>
    %cst_16 = arith.constant 0.87758255 : f32
    %34 = vector.broadcast %cst_16 : f32 to vector<8x64xf32>
    %35 = arith.mulf %27, %34 : vector<8x64xf32>
    %cst_17 = arith.constant 0.47942555 : f32
    %36 = vector.broadcast %cst_17 : f32 to vector<8x64xf32>
    %37 = arith.mulf %33, %36 : vector<8x64xf32>
    %38 = arith.subf %35, %37 : vector<8x64xf32>
    %cst_18 = arith.constant -0.87758255 : f32
    %39 = vector.broadcast %cst_18 : f32 to vector<8x64xf32>
    %40 = arith.cmpf ogt, %27, %39 : vector<8x64xf32>
    %cst_19 = arith.constant 0.239712775 : f32
    %41 = vector.broadcast %cst_19 : f32 to vector<8x64xf32>
    %42 = arith.subf %27, %41 : vector<8x64xf32>
    %43 = arith.select %40, %38, %42 : vector<8x64xi1>, vector<8x64xf32>
    %c0_20 = arith.constant 0 : index
    %c0_21 = arith.constant 0 : index
    %44 = vector.load %arg5[%c0_20, %c0_21] : memref<8x1xi32, #tpu.memory_space<vmem>>, vector<8x1xi32>
    %45 = tpu.iota {dimensions = array<i32: 1>} : vector<8x64xi32>
    %46 = vector.broadcast %44 : vector<8x1xi32> to vector<8x64xi32>
    %47 = arith.cmpi eq, %45, %46 : vector<8x64xi32>
    %48 = arith.select %47, %43, %27 : vector<8x64xi1>, vector<8x64xf32>
    %cst_22 = arith.constant 6.400000e+01 : f32
    %49 = vector.broadcast %cst_22 : f32 to vector<8x64xf32>
    %50 = arith.mulf %48, %49 : vector<8x64xf32>
    %c0_23 = arith.constant 0 : index
    %c0_24 = arith.constant 0 : index
    %51 = vector.load %arg6[%c0_23, %c0_24] : memref<8x64xf32, #tpu.memory_space<vmem>>, vector<8x64xf32>
    tpu.vector_store %arg6[%c0_23, %c0_24], %50 {strides = array<i32>} : memref<8x64xf32, #tpu.memory_space<vmem>>, vector<8x64xf32>,
    return
  }
  func.func @transform_0(%arg0: i32) -> (i32, i32) {
    %c0_i32 = arith.constant 0 : i32
    %c0_i32_0 = arith.constant 0 : i32
    return %arg0, %c0_i32 : i32, i32
  }
  func.func @transform_1(%arg0: i32) -> (i32, i32) {
    %c0_i32 = arith.constant 0 : i32
    %c0_i32_0 = arith.constant 0 : i32
    %c0_i32_1 = arith.constant 0 : i32
    return %c0_i32, %c0_i32_0 : i32, i32
  }
  func.func @transform_2(%arg0: i32) -> (i32, i32) {
    %c0_i32 = arith.constant 0 : i32
    %c0_i32_0 = arith.constant 0 : i32
    %c0_i32_1 = arith.constant 0 : i32
    return %c0_i32, %c0_i32_0 : i32, i32
  }
  func.func @transform_3(%arg0: i32) -> (i32, i32) {
    %c0_i32 = arith.constant 0 : i32
    %c0_i32_0 = arith.constant 0 : i32
    %c0_i32_1 = arith.constant 0 : i32
    return %c0_i32, %c0_i32_0 : i32, i32
  }
  func.func @transform_4(%arg0: i32) -> (i32, i32) {
    %c0_i32 = arith.constant 0 : i32
    %c0_i32_0 = arith.constant 0 : i32
    return %arg0, %c0_i32 : i32, i32
  }
  func.func @transform_5(%arg0: i32) -> (i32, i32) {
    %c0_i32 = arith.constant 0 : i32
    %c0_i32_0 = arith.constant 0 : i32
    return %arg0, %c0_i32 : i32, i32
  }
}

</mosaic_0001>

<llo_original>
// kernel: tpu_custom_call.1
$region0: #{tpu_custom_call.1}
  #allocation0 [shape = 'u32[]', space=smem, size = 0x4, offset = 0x4, fixed_abs, tag = 'smem constant byte address 0x4 - core index']
  #allocation1 [shape = 'u32[144,128]{1,0:T(1,128)}', space=vmem, size = 0x12000, scoped, tag = 'internal scratch']
  %s0 = inlined_call_operand.vmem [shape: f32[16,32], index: 0, kind: input, shape index: {}]
  %s1 = inlined_call_operand.hbm [shape: f32[32,32], index: 1, kind: input, shape index: {}]
  %s2 = inlined_call_operand.vmem [shape: f32[1,32], index: 2, kind: input, shape index: {}]
  %s3 = inlined_call_operand.hbm [shape: f32[32,64], index: 3, kind: input, shape index: {}]
  %s4 = inlined_call_operand.vmem [shape: s32[16,1], index: 4, kind: input, shape index: {}]
  %s5 = inlined_call_operand.hbm [shape: f32[16,64], index: 5, kind: output, shape index: {}]
  %s6 = sld [smem:[#allocation0]]
  $region61: #{tpu_custom_call.1} parent=0
    _
  %s8 = ssub.s32 1, %s6
  %s9 = scalar_select 0, %s8, %s6
  $region1: #{tpu_custom_call.1} parent=0
    #allocation2 [shape = 'u8[16384]{0}', space=vmem, size = 0x4000, scoped, tag = 'input window, operand 1, single buffered']
    #allocation3 [shape = 's32[2]{0}', space=sflag, size = 0x8, scoped, tag = 'scoped memory for tpu_custom_call.1']
    #allocation4 [shape = 's32[2]{0}', space=sflag, size = 0x8, scoped, tag = 'scoped memory for tpu_custom_call.1']
    #allocation5 [shape = 'u8[16384]{0}', space=vmem, size = 0x4000, scoped, tag = 'input window, operand 3, single buffered']
    #allocation6 [shape = 's32[1]{0}', space=sflag, size = 0x4, scoped, tag = 'scoped memory for tpu_custom_call.1']
    #allocation7 [shape = 'u8[8192]{0}', space=vmem, size = 0x2000, scoped, tag = 'output window, operand 0']
    %10 = vsyncpa [#allocation3], 0
    %11 = vsyncpa [#allocation6], 0
    %12 = vsyncpa [#allocation4], 0
    %s13 = scalar_lea.sflag [#allocation4], 1
    %14 = vsyncpa %s13, 0
    loop: start=0, step=1, limit=4
    $region2: #{tpu_custom_call.1} parent=1 // loop_pre_header
      _
    $region3: #{tpu_custom_call.1} parent=1 // loop_header
      %s16 = sphi 0, %s20
      %p17 = scmp.ge.s32.totalorder %s16, 4
      %s26 = sphi 0, %s28
      %s29 = sphi 0, %s26
      %s30 = sphi 0, %s29
      %s46 = sphi 0, %s30
      %s50 = sphi 0, %s50
      %s52 = sphi 0, %s50
      %s53 = sphi 0, %s52
      %s67 = sphi 0, %s53
      %s71 = sphi 0, %s71
      %s73 = sphi 0, %s71
      %s74 = sphi 0, %s73
      %s88 = sphi 0, %s74
      %s92 = sphi 0, %s92
      %s94 = sphi 0, %s92
      %s95 = sphi 0, %s94
      %s109 = sphi 0, %s95
      %s115 = sphi 0, %s117
      %s118 = sphi 0, %s115
      %s119 = sphi 0, %s118
      %s135 = sphi 0, %s119
      %s141 = sphi 0, %s143
      %s144 = sphi 0, %s141
      %s145 = sphi 0, %s144
      %s161 = sphi 0, %s145
    $region4: #{tpu_custom_call.1} parent=1 // loop_header_branch
      %19 = sbr.rel (%p17) target = $region8
    $region5: #{tpu_custom_call.1} parent=1 // loop_body
      %s21 = ssub.s32 %s16, 1
      %s22 = ssub.s32 %s16, 2
      %s23 = sadd.s32 %s16, 1
      %s24 = ssub.s32 %s16, %s23
      %p25 = scmp.eq.s32.totalorder %s24, 0
      %s27 = sadd.s32 %s26, 1
      %s28 = scalar_select %p25, %s26, %s27
      %p31 = pneg %p25
      %p32 = scmp.eq.s32.totalorder %s16, 1
      %p33 = por %p31, %p32
      %p34 = scmp.ne.s32.totalorder %s26, %s29
      %p35 = scmp.eq.s32.totalorder %s16, 0
      %p36 = por %p34, %p35
      %p37 = scmp.ne.s32.totalorder %s26, %s29
      %p38 = scmp.eq.s32.totalorder %s21, 1
      %p39 = por %p37, %p38
      %p40 = scmp.ne.s32.totalorder %s29, %s30
      %p41 = scmp.eq.s32.totalorder %s21, 0
      %p42 = por %p40, %p41
      %p43 = scmp.ne.s32.totalorder %s29, %s30
      %p44 = scmp.eq.s32.totalorder %s22, 1
      %p45 = por %p43, %p44
      %p47 = scmp.ne.s32.totalorder %s30, %s46
      %p48 = scmp.eq.s32.totalorder %s22, 0
      %p49 = por %p47, %p48
      %s51 = sadd.s32 %s50, 1
      %p54 = scmp.eq.s32.totalorder %s16, 1
      %p55 = scmp.ne.s32.totalorder %s50, %s52
      %p56 = scmp.eq.s32.totalorder %s16, 0
      %p57 = por %p55, %p56
      %p58 = scmp.ne.s32.totalorder %s50, %s52
      %p59 = scmp.eq.s32.totalorder %s21, 1
      %p60 = por %p58, %p59
      %p61 = scmp.ne.s32.totalorder %s52, %s53
      %p62 = scmp.eq.s32.totalorder %s21, 0
      %p63 = por %p61, %p62
      %p64 = scmp.ne.s32.totalorder %s52, %s53
      %p65 = scmp.eq.s32.totalorder %s22, 1
      %p66 = por %p64, %p65
      %p68 = scmp.ne.s32.totalorder %s53, %s67
      %p69 = scmp.eq.s32.totalorder %s22, 0
      %p70 = por %p68, %p69
      %s72 = sadd.s32 %s71, 1
      %p75 = scmp.eq.s32.totalorder %s16, 1
      %p76 = scmp.ne.s32.totalorder %s71, %s73
      %p77 = scmp.eq.s32.totalorder %s16, 0
      %p78 = por %p76, %p77
      %p79 = scmp.ne.s32.totalorder %s71, %s73
      %p80 = scmp.eq.s32.totalorder %s21, 1
      %p81 = por %p79, %p80
      %p82 = scmp.ne.s32.totalorder %s73, %s74
      %p83 = scmp.eq.s32.totalorder %s21, 0
      %p84 = por %p82, %p83
      %p85 = scmp.ne.s32.totalorder %s73, %s74
      %p86 = scmp.eq.s32.totalorder %s22, 1
      %p87 = por %p85, %p86
      %p89 = scmp.ne.s32.totalorder %s74, %s88
      %p90 = scmp.eq.s32.totalorder %s22, 0
      %p91 = por %p89, %p90
      %s93 = sadd.s32 %s92, 1
      %p96 = scmp.eq.s32.totalorder %s16, 1
      %p97 = scmp.ne.s32.totalorder %s92, %s94
      %p98 = scmp.eq.s32.totalorder %s16, 0
      %p99 = por %p97, %p98
      %p100 = scmp.ne.s32.totalorder %s92, %s94
      %p101 = scmp.eq.s32.totalorder %s21, 1
      %p102 = por %p100, %p101
      %p103 = scmp.ne.s32.totalorder %s94, %s95
      %p104 = scmp.eq.s32.totalorder %s21, 0
      %p105 = por %p103, %p104
      %p106 = scmp.ne.s32.totalorder %s94, %s95
      %p107 = scmp.eq.s32.totalorder %s22, 1
      %p108 = por %p106, %p107
      %p110 = scmp.ne.s32.totalorder %s95, %s109
      %p111 = scmp.eq.s32.totalorder %s22, 0
      %p112 = por %p110, %p111
      %s113 = ssub.s32 %s16, %s23
      %p114 = scmp.eq.s32.totalorder %s113, 0
      %s116 = sadd.s32 %s115, 1
      %s117 = scalar_select %p114, %s115, %s116
      %p120 = pneg %p114
      %p121 = scmp.eq.s32.totalorder %s16, 1
      %p122 = por %p120, %p121
      %p123 = scmp.ne.s32.totalorder %s115, %s118
      %p124 = scmp.eq.s32.totalorder %s16, 0
      %p125 = por %p123, %p124
      %p126 = scmp.ne.s32.totalorder %s115, %s118
      %p127 = scmp.eq.s32.totalorder %s21, 1
      %p128 = por %p126, %p127
      %p129 = scmp.ne.s32.totalorder %s118, %s119
      %p130 = scmp.eq.s32.totalorder %s21, 0
      %p131 = por %p129, %p130
      %p132 = scmp.ne.s32.totalorder %s118, %s119
      %p133 = scmp.eq.s32.totalorder %s22, 1
      %p134 = por %p132, %p133
      %p136 = scmp.ne.s32.totalorder %s119, %s135
      %p137 = scmp.eq.s32.totalorder %s22, 0
      %p138 = por %p136, %p137
      %s139 = ssub.s32 %s16, %s23
      %p140 = scmp.eq.s32.totalorder %s139, 0
      %s142 = sadd.s32 %s141, 1
      %s143 = scalar_select %p140, %s141, %s142
      %p146 = pneg %p140
      %p147 = scmp.eq.s32.totalorder %s16, 1
      %p148 = por %p146, %p147
      %p149 = scmp.ne.s32.totalorder %s141, %s144
      %p150 = scmp.eq.s32.totalorder %s16, 0
      %p151 = por %p149, %p150
      %p152 = scmp.ne.s32.totalorder %s141, %s144
      %p153 = scmp.eq.s32.totalorder %s21, 1
      %p154 = por %p152, %p153
      %p155 = scmp.ne.s32.totalorder %s144, %s145
      %p156 = scmp.eq.s32.totalorder %s21, 0
      %p157 = por %p155, %p156
      %p158 = scmp.ne.s32.totalorder %s144, %s145
      %p159 = scmp.eq.s32.totalorder %s22, 1
      %p160 = por %p158, %p159
      %p162 = scmp.ne.s32.totalorder %s145, %s161
      %p163 = scmp.eq.s32.totalorder %s22, 0
      %p164 = por %p162, %p163
      %p165 = scmp.le.s32.totalorder 1, %s16
      %p166 = scmp.lt.s32.totalorder %s16, 3
      %p167 = pnand %p165, %p166
      %p168 = pneg %p167
      // Predicated region
      $region9: #{tpu_custom_call.1} parent=5 // pred_check
        _
      $region10: #{tpu_custom_call.1} parent=5 // pred_check_branch
        %170 = sbr.rel (%p167) target = $region12
      $region11: #{tpu_custom_call.1} parent=5 // pred_region
        %s171 = ssub.s32 %s16, 1
        // Predicated region
        $region13: #{tpu_custom_call.1} parent=11 // pred_check
          %p172 = pneg %p63
        $region14: #{tpu_custom_call.1} parent=11 // pred_check_branch
          %174 = sbr.rel (%p172) target = $region16
        $region15: #{tpu_custom_call.1} parent=11 // pred_region
          %s176 = ssub.s32 512, 512
          %177 = vsyncadd [#allocation3], %s176
          %s178 = sshll.u32 [#allocation2], 4
          %s179 = int_to_ptr.vmem [resolvable:$true] %s178
          %184 = dma.hbm_to_vmem [thread:$0]  %s1, 512, %s179, [#allocation3], 128, 128, 8
        $region16: #{tpu_custom_call.1} parent=11 // pred_fallthru
          _
        // Predicated region
        $region17: #{tpu_custom_call.1} parent=11 // pred_check
          %p185 = pneg %p84
        $region18: #{tpu_custom_call.1} parent=11 // pred_check_branch
          %187 = sbr.rel (%p185) target = $region20
        $region19: #{tpu_custom_call.1} parent=11 // pred_region
          _
        $region20: #{tpu_custom_call.1} parent=11 // pred_fallthru
          _
        // Predicated region
        $region21: #{tpu_custom_call.1} parent=11 // pred_check
          %p188 = pneg %p105
        $region22: #{tpu_custom_call.1} parent=11 // pred_check_branch
          %190 = sbr.rel (%p188) target = $region24
        $region23: #{tpu_custom_call.1} parent=11 // pred_region
          %s192 = ssub.s32 512, 512
          %193 = vsyncadd [#allocation6], %s192
          %s194 = sshll.u32 [#allocation5], 4
          %s195 = int_to_ptr.vmem [resolvable:$true] %s194
          %200 = dma.hbm_to_vmem [thread:$0]  %s3, 512, %s195, [#allocation6], 128, 128, 8
        $region24: #{tpu_custom_call.1} parent=11 // pred_fallthru
          _
      $region12: #{tpu_custom_call.1} parent=5 // pred_fallthru
        _
      %p201 = scmp.lt.s32.totalorder %s16, 2
      // Predicated region
      $region25: #{tpu_custom_call.1} parent=5 // pred_check
        %p202 = pneg %p201
      $region26: #{tpu_custom_call.1} parent=5 // pred_check_branch
        %204 = sbr.rel (%p202) target = $region28
      $region27: #{tpu_custom_call.1} parent=5 // pred_region
        // Predicated region
        $region29: #{tpu_custom_call.1} parent=27 // pred_check
          %p205 = pneg %p36
        $region30: #{tpu_custom_call.1} parent=27 // pred_check_branch
          %207 = sbr.rel (%p205) target = $region32
        $region31: #{tpu_custom_call.1} parent=27 // pred_region
          %p208 = scmp.lt.s32.totalorder %s16, 1
          %s209 = scalar_select %p208, %s16, 1
          %s210 = smul.addr %s209, 8
          %s211 = scalar_lea.vmem %s0, %s210
        $region32: #{tpu_custom_call.1} parent=27 // pred_fallthru
          _
        // Predicated region
        $region33: #{tpu_custom_call.1} parent=27 // pred_check
          %p212 = pneg %p125
        $region34: #{tpu_custom_call.1} parent=27 // pred_check_branch
          %214 = sbr.rel (%p212) target = $region36
        $region35: #{tpu_custom_call.1} parent=27 // pred_region
          %p215 = scmp.lt.s32.totalorder %s16, 1
          %s216 = scalar_select %p215, %s16, 1
          %s217 = smul.addr %s216, 8
          %s218 = scalar_lea.vmem %s4, %s217
        $region36: #{tpu_custom_call.1} parent=27 // pred_fallthru
          _
      $region28: #{tpu_custom_call.1} parent=5 // pred_fallthru
        _
      %p219 = scmp.le.s32.totalorder 1, %s16
      %p220 = scmp.lt.s32.totalorder %s16, 3
      %p221 = pnand %p219, %p220
      %p222 = pneg %p221
      // Predicated region
      $region37: #{tpu_custom_call.1} parent=5 // pred_check
        _
      $region38: #{tpu_custom_call.1} parent=5 // pred_check_branch
        %224 = sbr.rel (%p221) target = $region40
      $region39: #{tpu_custom_call.1} parent=5 // pred_region
        %s225 = ssub.s32 %s16, 1
        // Predicated region
        $region41: #{tpu_custom_call.1} parent=39 // pred_check
          %p226 = pneg %p63
        $region42: #{tpu_custom_call.1} parent=39 // pred_check_branch
          %228 = sbr.rel (%p226) target = $region44
        $region43: #{tpu_custom_call.1} parent=39 // pred_region
          %229 = dma.done [#allocation3], 512
        $region44: #{tpu_custom_call.1} parent=39 // pred_fallthru
          _
        // Predicated region
        $region45: #{tpu_custom_call.1} parent=39 // pred_check
          %p230 = pneg %p105
        $region46: #{tpu_custom_call.1} parent=39 // pred_check_branch
          %232 = sbr.rel (%p230) target = $region48
        $region47: #{tpu_custom_call.1} parent=39 // pred_region
          %233 = dma.done [#allocation6], 512
        $region48: #{tpu_custom_call.1} parent=39 // pred_fallthru
          _
        %p234 = scmp.lt.s32.totalorder %s21, 1
        %s235 = scalar_select %p234, %s21, 1
        %s236 = smul.addr %s235, 8
        %s237 = scalar_lea.vmem %s0, %s236
        %p238 = pneg %p42
        %p239 = pneg %p39
        %p240 = pneg %p63
        %p241 = pneg %p60
        %p242 = pneg %p84
        %p243 = pneg %p81
        %p244 = pneg %p105
        %p245 = pneg %p102
        %p246 = scmp.lt.s32.totalorder %s21, 1
        %s247 = scalar_select %p246, %s21, 1
        %s248 = smul.addr %s247, 8
        %s249 = scalar_lea.vmem %s4, %s248
        %p250 = pneg %p131
        %p251 = pneg %p128
        %p252 = pneg %p157
        %p253 = pneg %p154
        %s254 = sand.u32 %s144, 1
        %s255 = scalar_lea.sflag [#allocation4], %s254
        %s256 = sand.u32 %s144, 1
        %s257 = smul.addr %s256, 8
        %s258 = scalar_lea.vmem [#allocation7], %s257
        %p259 = scmp.lt.s32.totalorder %s21, 1
        %s260 = scalar_select %p259, %s21, 1
        %s261 = smul.addr %s260, 8
        %s262 = scalar_lea.vmem %s0, %s261
        %p263 = scmp.lt.s32.totalorder %s21, 1
        %s264 = scalar_select %p263, %s21, 1
        %s265 = smul.addr %s264, 8
        %s266 = scalar_lea.vmem %s4, %s265
        %v267 = vld [vmem:[%s262] sm:$0xff]
        %v268 = vld [vmem:[#allocation2] sm:$0xff]
        %v269 = vld [vmem:[#allocation2 + $0x8] sm:$0xff]
        %v270 = vld [vmem:[#allocation2 + $0x10] sm:$0xff]
        %v271 = vld [vmem:[#allocation2 + $0x18] sm:$0xff]
        %v272 = vld [vmem:[%s2] sm:$0x1]
        %v274 = vlaneseq
        %v275 = vshrl.u32 %v274, 7
        %v276 = vsub.s32 0, %v275
        %v277 = vrot.slane %v272, %v276
        %vm279 = vcmask 261120
        %v281 = vsel %vm279, %v267, 0
        %283 = vmatprep.subr.mxu0 0.0
        %284 = vmatpush1.msra.mxu0 %v268
        %285 = vmatprep.subr.mxu0 0.0
        %286 = vmatpush1.msra.mxu0 %v269
        %287 = vmatprep.subr.mxu0 0.0
        %288 = vmatpush1.msra.mxu0 %v270
        %289 = vmatprep.subr.mxu0 0.0
        %290 = vmatpush1.msra.mxu0 %v271
        %291 = vmatprep.subr.mxu0 0.0
        %292 = vmatpush1.msra.mxu0 0.0
        %293 = vmatprep.subr.mxu0 0.0
        %294 = vmatpush1.msra.mxu0 0.0
        %295 = vmatprep.subr.mxu0 0.0
        %296 = vmatpush1.msra.mxu0 0.0
        %297 = vmatprep.subr.mxu0 0.0
        %298 = vmatpush1.msra.mxu0 0.0
        %299 = vmatprep.subr.mxu0 0.0
        %300 = vmatpush1.msra.mxu0 0.0
        %301 = vmatprep.subr.mxu0 0.0
        %302 = vmatpush1.msra.mxu0 0.0
        %303 = vmatprep.subr.mxu0 0.0
        %304 = vmatpush1.msra.mxu0 0.0
        %305 = vmatprep.subr.mxu0 0.0
        %306 = vmatpush1.msra.mxu0 0.0
        %307 = vmatprep.subr.mxu0 0.0
        %308 = vmatpush1.msra.mxu0 0.0
        %309 = vmatprep.subr.mxu0 0.0
        %310 = vmatpush1.msra.mxu0 0.0
        %311 = vmatprep.subr.mxu0 0.0
        %312 = vmatpush1.msra.mxu0 0.0
        %313 = vmatprep.subr.mxu0 0.0
        %314 = vmatpush1.msra.mxu0 0.0
        %315 = vmatprep.subr.mxu0 0.0
        %316 = vmatpush1.msra.mxu0 0.0
        %317 = vmatprep.subr.mxu0 0.0
        %318 = vmatpush1.msra.mxu0 0.0
        %319 = vmatprep.subr.mxu0 0.0
        %320 = vmatpush1.msra.mxu0 0.0
        %321 = vmatprep.subr.mxu0 0.0
        %322 = vmatpush1.msra.mxu0 0.0
        %323 = vmatprep.subr.mxu0 0.0
        %324 = vmatpush1.msra.mxu0 0.0
        %325 = vmatprep.subr.mxu0 0.0
        %326 = vmatpush1.msra.mxu0 0.0
        %327 = vmatprep.subr.mxu0 0.0
        %328 = vmatpush1.msra.mxu0 0.0
        %329 = vmatprep.subr.mxu0 0.0
        %330 = vmatpush1.msra.mxu0 0.0
        %331 = vmatprep.subr.mxu0 0.0
        %332 = vmatpush1.msra.mxu0 0.0
        %333 = vmatprep.subr.mxu0 0.0
        %334 = vmatpush1.msra.mxu0 0.0
        %335 = vmatprep.subr.mxu0 0.0
        %336 = vmatpush1.msra.mxu0 0.0
        %337 = vmatprep.subr.mxu0 0.0
        %338 = vmatpush1.msra.mxu0 0.0
        %339 = vmatprep.subr.mxu0 0.0
        %340 = vmatpush1.msra.mxu0 0.0
        %341 = vmatprep.subr.mxu0 0.0
        %342 = vmatpush1.msra.mxu0 0.0
        %343 = vmatprep.subr.mxu0 0.0
        %344 = vmatpush1.msra.mxu0 0.0
        %345 = vmatprep.subr.mxu0 0.0
        %346 = vmatpush1.msra.mxu0 0.0
        %347 = vmatprep.mubr.f32.mxu0 0.0
        %348 = vmatmul.mubr.f32.gmra.mrb[0].mxu0 %v281
        %v349 = vpop.f32.mrb[0].mxu0
        %v350 = vadd.f32 %v277, %v349
        %v351 = vpop.f32.mrb[0].mxu0
        %352 = vdwg.mxu0
        %v353 = vmul.f32 %v350, %v350
        %v354 = vsel %vm279, %v353, 0.0
        %355 = vadd.xlane.f32.xlu0 %v354
        %v356 = vpop.xlane.xlu0 %355
        %v357 = vrsqrt.pop %v356
        %v358 = vmul.f32 %v356, %v357
        %vm359 = vcmp.eq.f32.partialorder %v356, inf
        %v360 = vsel %vm359, %v356, %v358
        %vm361 = vcmp.eq.f32.partialorder %v356, 0.0
        %v362 = vand.u32 %v356, 2147483648
        %v363 = vsel %vm361, %v362, %v360
        %v364 = vmax.f32 %v363, 1e-12
        %v365 = vrcp.pop %v364
        %v366 = vmul.f32 %v350, %v365
        %v367 = vld [vmem:[#allocation5] sm:$0xff]
        %v368 = vld [vmem:[#allocation5 + $0x8] sm:$0xff]
        %v369 = vld [vmem:[#allocation5 + $0x10] sm:$0xff]
        %v370 = vld [vmem:[#allocation5 + $0x18] sm:$0xff]
        %v371 = vmul.f32 %v367, %v367
        %v372 = vmul.f32 %v368, %v368
        %v373 = vmul.f32 %v369, %v369
        %v374 = vmul.f32 %v370, %v370
        %vm375 = vcmask 523264
        %v376 = vsel %vm375, %v371, 0.0
        %v377 = vsel %vm375, %v372, 0.0
        %v378 = vadd.f32 %v376, %v377
        %v379 = vsel %vm375, %v373, 0.0
        %v380 = vadd.f32 %v378, %v379
        %v381 = vsel %vm375, %v374, 0.0
        %v382 = vadd.f32 %v380, %v381
        %v383 = vrot.slane %v382, 4
        %v384 = vadd.f32 %v382, %v383
        %v385 = vrot.slane %v384, 2
        %v386 = vadd.f32 %v384, %v385
        %v387 = vrot.slane %v386, 1
        %v388 = vadd.f32 %v386, %v387
        %v389 = vrsqrt.pop %v388
        %v390 = vmul.f32 %v388, %v389
        %vm391 = vcmp.eq.f32.partialorder %v388, inf
        %v392 = vsel %vm391, %v388, %v390
        %vm393 = vcmp.eq.f32.partialorder %v388, 0.0
        %v394 = vand.u32 %v388, 2147483648
        %v395 = vsel %vm393, %v394, %v392
        %v396 = vmax.f32 %v395, 1e-12
        %v397 = vrcp.pop %v396
        %v398 = vmul.f32 %v367, %v397
        %v399 = vmul.f32 %v368, %v397
        %v400 = vmul.f32 %v369, %v397
        %v401 = vmul.f32 %v370, %v397
        %v403 = vsel %vm279, %v366, 0
        %405 = vmatprep.subr.mxu0 0.0
        %406 = vmatpush1.msra.mxu0 %v398
        %407 = vmatprep.subr.mxu0 0.0
        %408 = vmatpush1.msra.mxu0 %v399
        %409 = vmatprep.subr.mxu0 0.0
        %410 = vmatpush1.msra.mxu0 %v400
        %411 = vmatprep.subr.mxu0 0.0
        %412 = vmatpush1.msra.mxu0 %v401
        %413 = vmatprep.subr.mxu0 0.0
        %414 = vmatpush1.msra.mxu0 0.0
        %415 = vmatprep.subr.mxu0 0.0
        %416 = vmatpush1.msra.mxu0 0.0
        %417 = vmatprep.subr.mxu0 0.0
        %418 = vmatpush1.msra.mxu0 0.0
        %419 = vmatprep.subr.mxu0 0.0
        %420 = vmatpush1.msra.mxu0 0.0
        %421 = vmatprep.subr.mxu0 0.0
        %422 = vmatpush1.msra.mxu0 0.0
        %423 = vmatprep.subr.mxu0 0.0
        %424 = vmatpush1.msra.mxu0 0.0
        %425 = vmatprep.subr.mxu0 0.0
        %426 = vmatpush1.msra.mxu0 0.0
        %427 = vmatprep.subr.mxu0 0.0
        %428 = vmatpush1.msra.mxu0 0.0
        %429 = vmatprep.subr.mxu0 0.0
        %430 = vmatpush1.msra.mxu0 0.0
        %431 = vmatprep.subr.mxu0 0.0
        %432 = vmatpush1.msra.mxu0 0.0
        %433 = vmatprep.subr.mxu0 0.0
        %434 = vmatpush1.msra.mxu0 0.0
        %435 = vmatprep.subr.mxu0 0.0
        %436 = vmatpush1.msra.mxu0 0.0
        %437 = vmatprep.subr.mxu0 0.0
        %438 = vmatpush1.msra.mxu0 0.0
        %439 = vmatprep.subr.mxu0 0.0
        %440 = vmatpush1.msra.mxu0 0.0
        %441 = vmatprep.subr.mxu0 0.0
        %442 = vmatpush1.msra.mxu0 0.0
        %443 = vmatprep.subr.mxu0 0.0
        %444 = vmatpush1.msra.mxu0 0.0
        %445 = vmatprep.subr.mxu0 0.0
        %446 = vmatpush1.msra.mxu0 0.0
        %447 = vmatprep.subr.mxu0 0.0
        %448 = vmatpush1.msra.mxu0 0.0
        %449 = vmatprep.subr.mxu0 0.0
        %450 = vmatpush1.msra.mxu0 0.0
        %451 = vmatprep.subr.mxu0 0.0
        %452 = vmatpush1.msra.mxu0 0.0
        %453 = vmatprep.subr.mxu0 0.0
        %454 = vmatpush1.msra.mxu0 0.0
        %455 = vmatprep.subr.mxu0 0.0
        %456 = vmatpush1.msra.mxu0 0.0
        %457 = vmatprep.subr.mxu0 0.0
        %458 = vmatpush1.msra.mxu0 0.0
        %459 = vmatprep.subr.mxu0 0.0
        %460 = vmatpush1.msra.mxu0 0.0
        %461 = vmatprep.subr.mxu0 0.0
        %462 = vmatpush1.msra.mxu0 0.0
        %463 = vmatprep.subr.mxu0 0.0
        %464 = vmatpush1.msra.mxu0 0.0
        %465 = vmatprep.subr.mxu0 0.0
        %466 = vmatpush1.msra.mxu0 0.0
        %467 = vmatprep.subr.mxu0 0.0
        %468 = vmatpush1.msra.mxu0 0.0
        %469 = vmatprep.mubr.f32.mxu0 0.0
        %470 = vmatmul.mubr.f32.gmra.mrb[0].mxu0 %v403
        %v471 = vpop.f32.mrb[0].mxu0
        %v472 = vadd.f32 0.0, %v471
        %v473 = vpop.f32.mrb[0].mxu0
        %474 = vdwg.mxu0
        %v475 = vmax.f32 %v472, -1.0
        %v476 = vmin.f32 %v475, 1.0
        %v477 = vmul.f32 %v476, %v476
        %v478 = vsub.f32 1.0, %v477
        %v479 = vmax.f32 %v478, 0.0
        %v480 = vrsqrt.pop %v479
        %v481 = vmul.f32 %v479, %v480
        %vm482 = vcmp.eq.f32.partialorder %v479, inf
        %v483 = vsel %vm482, %v479, %v481
        %vm484 = vcmp.eq.f32.partialorder %v479, 0.0
        %v485 = vand.u32 %v479, 2147483648
        %v486 = vsel %vm484, %v485, %v483
        %v487 = vmul.f32 %v476, 0.87758255
        %v488 = vmul.f32 %v486, 0.47942555
        %v489 = vsub.f32 %v487, %v488
        %vm490 = vcmp.gt.f32.partialorder %v476, -0.87758255
        %v491 = vsub.f32 %v476, 0.23971277
        %v492 = vsel %vm490, %v489, %v491
        %v493 = vld [vmem:[%s266] sm:$0xff]
        %v494 = vlaneseq
        %v495 = vand.u32 %v494, 127
        %496 = vset.pattern.permute.xlu0 0
        %497 = vperm.xlu0 %496, %v493
        %v498 = vpop.permute.xlu0 %497
        %vm499 = vcmp.eq.s32.totalorder %v495, %v498
        %v500 = vsel %vm499, %v492, %v476
        %v501 = vmul.f32 %v500, 64.0
        %502 = vst.msk [vmem:[%s258] sm:$0xff] %vm375, %v501
        %s503 = sand.u32 %s144, 1
        %s504 = scalar_lea.sflag [#allocation4], %s503
        %s505 = sand.u32 %s144, 1
        %s506 = smul.addr %s505, 8
        %s507 = scalar_lea.vmem [#allocation7], %s506
        // Predicated region
        $region49: #{tpu_custom_call.1} parent=39 // pred_check
          %p508 = pneg %p154
        $region50: #{tpu_custom_call.1} parent=39 // pred_check_branch
          %510 = sbr.rel (%p508) target = $region52
        $region51: #{tpu_custom_call.1} parent=39 // pred_region
          %s512 = ssub.s32 128, 128
          %513 = vsyncadd %s504, %s512
          %s514 = smul.addr %s21, 128
          %s515 = scalar_lea.hbm %s5, %s514
          %s517 = sshll.u32 %s507, 4
          %s518 = int_to_ptr.vmem [resolvable:$true] %s517
          %520 = dma.vmem_to_hbm [thread:$0]  %s518, 128, %s515, %s504
        $region52: #{tpu_custom_call.1} parent=39 // pred_fallthru
          _
      $region40: #{tpu_custom_call.1} parent=5 // pred_fallthru
        _
      %p521 = scmp.le.s32.totalorder 2, %s16
      // Predicated region
      $region53: #{tpu_custom_call.1} parent=5 // pred_check
        %p522 = pneg %p521
      $region54: #{tpu_custom_call.1} parent=5 // pred_check_branch
        %524 = sbr.rel (%p522) target = $region56
      $region55: #{tpu_custom_call.1} parent=5 // pred_region
        %s525 = ssub.s32 %s16, 2
        // Predicated region
        $region57: #{tpu_custom_call.1} parent=55 // pred_check
          %p526 = pneg %p160
        $region58: #{tpu_custom_call.1} parent=55 // pred_check_branch
          %528 = sbr.rel (%p526) target = $region60
        $region59: #{tpu_custom_call.1} parent=55 // pred_region
          %s529 = sand.u32 %s145, 1
          %s530 = scalar_lea.sflag [#allocation4], %s529
          %s531 = sand.u32 %s145, 1
          %s532 = smul.addr %s531, 8
          %s533 = scalar_lea.vmem [#allocation7], %s532
          %534 = dma.done %s530, 128
        $region60: #{tpu_custom_call.1} parent=55 // pred_fallthru
          _
      $region56: #{tpu_custom_call.1} parent=5 // pred_fallthru
        _
    $region6: #{tpu_custom_call.1} parent=1 // loop_footer
      %s20 = sadd.s32 1, %s16
    $region7: #{tpu_custom_call.1} parent=1 // loop_footer_branch
      %15 = sbr.rel target = $region3
    $region8: #{tpu_custom_call.1} parent=1 // loop_exit
      _
    %535 = vsyncpa [#allocation3], 1
    %s536 = scalar_lea.sflag [#allocation3], 1
    %537 = vsyncpa %s536, 1
    %538 = vsyncpa [#allocation6], 1
    %539 = vsyncpa [#allocation4], 1
    %s540 = scalar_lea.sflag [#allocation4], 1
    %541 = vsyncpa %s540, 1

</llo_original>
